<compile_context>
chip_gen: v5e
topology: v5e:2x2
jax: 0.10.0
libtpu: 0.0.40
codegen_flags: <defaults>
</compile_context>

<pallas_src>
import jax
import jax.numpy as jnp
from jax.experimental import pallas as pl
from jax.experimental.pallas import tpu as pltpu


def _value_fn_kernel(x_ref, w_ref, b_ref, o_ref):
    # x: (TB, D) native dtype, w: (1, D) f32, b: (1,) f32 scalar in SMEM
    # o: (TB, 1) f32
    x = x_ref[...].astype(jnp.float32)          # cast in-kernel (VPU slack)
    w = w_ref[...]                               # (1, D), broadcasts over rows
    b = b_ref[0]                                 # scalar read from SMEM
    # VPU elementwise multiply + XLU lane reduction; avoids an MXU detour that
    # would use 1/256 of the array and need a (1, D) transpose.
    y = jnp.sum(x * w, axis=-1, keepdims=True)   # (TB, 1) f32
    o_ref[...] = (y + b).astype(o_ref.dtype)


def _round_up(n, m):
    return ((n + m - 1) // m) * m


def _pick_batch_tile(batch, dim, itemsize):
    """Batch tile sized by an ~8 MiB byte budget, multiple of 8 rows.

    8 MiB per input buffer => 16 MiB double-buffered x + tiny weight/output,
    comfortably inside the 32 MiB scoped-VMEM default on every generation
    (including v7x's 64 MiB physical / 32 MiB scoped budget).
    """
    bytes_per_row = max(dim * itemsize, 1)
    tb = (8 * 1024 * 1024) // bytes_per_row
    # Keep >= ~4 grid steps for large batches so the megacore split gives both
    # v7x TensorCores work and DMA/compute overlap exists.
    tb = min(tb, _round_up(pl.cdiv(batch, 4), 8))
    tb = max(8, (tb // 8) * 8)
    # Never tile past the (rounded-up) batch itself.
    tb = min(tb, _round_up(batch, 8))
    return tb


@jax.jit
def linear_value_fn(x, weight, bias):
    """Pallas forward for Torch(features=identity, layers=[Linear(dim, 1)]).

    Args:
      x:      (batch, dim)  features in native dtype (f32 or bf16)
      weight: (1, dim)      nn.Linear(dim, 1) weight
      bias:   (1,)          nn.Linear(dim, 1) bias
    Returns:
      (batch, 1) float32
    """
    batch, dim = x.shape
    weight = weight.reshape((1, dim)).astype(jnp.float32)
    bias = bias.reshape((1,)).astype(jnp.float32)

    itemsize = jnp.dtype(x.dtype).itemsize
    tb = _pick_batch_tile(batch, dim, itemsize)
    grid = (pl.cdiv(batch, tb),)   # ragged last block handled by Pallas

    out = pl.pallas_call(
        _value_fn_kernel,
        out_shape=jax.ShapeDtypeStruct((batch, 1), jnp.float32),
        grid=grid,
        in_specs=[
            # Streamed, double-buffered batch tiles of x (native dtype).
            pl.BlockSpec((tb, dim), lambda i: (i, 0)),
            # Weight stays resident in VMEM across the whole grid.
            pl.BlockSpec((1, dim), lambda i: (0, 0)),
            # Bias is a scalar in SMEM (no padded VMEM tile, no per-step DMA).
            pl.BlockSpec(memory_space=pltpu.MemorySpace.SMEM),
        ],
        out_specs=pl.BlockSpec((tb, 1), lambda i: (i, 0)),
        compiler_params=pltpu.CompilerParams(
            dimension_semantics=("parallel",),
        ),
        cost_estimate=pl.CostEstimate(
            flops=2 * batch * dim,
            transcendentals=0,
            bytes_accessed=batch * dim * itemsize + dim * 4 + 4 + batch * 4,
        ),
    )(x, weight, bias)

    return out


if __name__ == "__main__":
    key = jax.random.PRNGKey(0)
    k_x, k_w, k_b, k_x2, k_x3 = jax.random.split(key, 5)

    # --- small demo shape consistent with the module ------------------------
    batch, dim = 8, 32
    x = jax.random.normal(k_x, (batch, dim), dtype=jnp.float32)

    # Deterministic nn.Linear(dim, 1) init: U(-1/sqrt(dim), 1/sqrt(dim))
    bound = 1.0 / (dim ** 0.5)
    weight = jax.random.uniform(k_w, (1, dim), minval=-bound, maxval=bound,
                                dtype=jnp.float32)
    bias = jax.random.uniform(k_b, (1,), minval=-bound, maxval=bound,
                              dtype=jnp.float32)

    out = jax.block_until_ready(linear_value_fn(x, weight, bias))
    ref = x @ weight.T + bias[None, :]
    assert out.shape == (batch, 1)
    assert jnp.allclose(out, ref, atol=1e-5, rtol=1e-5)

    # --- larger shape exercising a ragged last block (no pad copy) ----------
    batch2, dim2 = 260, 160
    x2 = jax.random.normal(k_x2, (batch2, dim2), dtype=jnp.float32)
    bound2 = 1.0 / (dim2 ** 0.5)
    w2 = jax.random.uniform(k_w, (1, dim2), minval=-bound2, maxval=bound2,
                            dtype=jnp.float32)
    b2 = jax.random.uniform(k_b, (1,), minval=-bound2, maxval=bound2,
                            dtype=jnp.float32)

    out2 = jax.block_until_ready(linear_value_fn(x2, w2, b2))
    ref2 = x2 @ w2.T + b2[None, :]
    assert out2.shape == (batch2, 1)
    assert jnp.allclose(out2, ref2, atol=1e-5, rtol=1e-5)

    # --- bf16 input streamed natively, cast to f32 inside the kernel --------
    x3 = jax.random.normal(k_x3, (batch2, dim2), dtype=jnp.float32
                           ).astype(jnp.bfloat16)
    out3 = jax.block_until_ready(linear_value_fn(x3, w2, b2))
    ref3 = x3.astype(jnp.float32) @ w2.T + b2[None, :]
    assert out3.shape == (batch2, 1)
    assert jnp.allclose(out3, ref3, atol=1e-4, rtol=1e-4)

    print("KERNEL_OK")
</pallas_src>

<mosaic_0001>
module attributes {stable_mosaic.version = 11 : i64} {
  func.func @_value_fn_kernel(%arg0: i32, %arg1: memref<8x32xf32, #tpu.memory_space<vmem>>, %arg2: memref<1x32xf32, #tpu.memory_space<vmem>>, %arg3: memref<1xf32, #tpu.memory_space<smem>>, %arg4: memref<8x1xf32, #tpu.memory_space<vmem>>) attributes {dimension_semantics = [#tpu.dimension_semantics<parallel>], iteration_bounds = array<i64: 1>, scalar_prefetch = 0 : i64, scratch_operands = 0 : i64, tpu.core_type = #tpu.core_type<tc>, window_params = [{transform_indices = @transform_0, window_bounds = array<i64: 8, 32>}, {pipeline_mode = #tpu.pipeline_mode<synchronous>, transform_indices = @transform_1, window_bounds = array<i64: 1, 32>}, {transform_indices = @transform_2, window_bounds = array<i64: 1>}, {transform_indices = @transform_3, window_bounds = array<i64: 8, 1>}]} {
    %c0 = arith.constant 0 : index
    %c0_0 = arith.constant 0 : index
    %0 = vector.load %arg1[%c0, %c0_0] : memref<8x32xf32, #tpu.memory_space<vmem>>, vector<8x32xf32>
    %c0_1 = arith.constant 0 : index
    %c0_2 = arith.constant 0 : index
    %1 = vector.load %arg2[%c0_1, %c0_2] : memref<1x32xf32, #tpu.memory_space<vmem>>, vector<1x32xf32>
    %c0_3 = arith.constant 0 : index
    %2 = memref.load %arg3[%c0_3] : memref<1xf32, #tpu.memory_space<smem>>
    %3 = vector.broadcast %1 : vector<1x32xf32> to vector<8x32xf32>
    %4 = arith.mulf %0, %3 : vector<8x32xf32>
    %cst = arith.constant dense<0.000000e+00> : vector<8xf32>
    %5 = vector.multi_reduction <add>, %4, %cst [1] : vector<8x32xf32> to vector<8xf32>
    %6 = vector.shape_cast %5 : vector<8xf32> to vector<8x1xf32>
    %7 = vector.broadcast %2 : f32 to vector<8x1xf32>
    %8 = arith.addf %6, %7 : vector<8x1xf32>
    %c0_4 = arith.constant 0 : index
    %c0_5 = arith.constant 0 : index
    %9 = vector.load %arg4[%c0_4, %c0_5] : memref<8x1xf32, #tpu.memory_space<vmem>>, vector<8x1xf32>
    tpu.vector_store %arg4[%c0_4, %c0_5], %8 {strides = array<i32>} : memref<8x1xf32, #tpu.memory_space<vmem>>, vector<8x1xf32>,
    return
  }
  func.func @transform_0(%arg0: i32) -> (i32, i32) {
    %c0_i32 = arith.constant 0 : i32
    %c0_i32_0 = arith.constant 0 : i32
    return %arg0, %c0_i32 : i32, i32
  }
  func.func @transform_1(%arg0: i32) -> (i32, i32) {
    %c0_i32 = arith.constant 0 : i32
    %c0_i32_0 = arith.constant 0 : i32
    %c0_i32_1 = arith.constant 0 : i32
    return %c0_i32, %c0_i32_0 : i32, i32
  }
  func.func @transform_2(%arg0: i32) -> i32 {
    %c0_i32 = arith.constant 0 : i32
    %c0_i32_0 = arith.constant 0 : i32
    return %c0_i32 : i32
  }
  func.func @transform_3(%arg0: i32) -> (i32, i32) {
    %c0_i32 = arith.constant 0 : i32
    %c0_i32_0 = arith.constant 0 : i32
    return %arg0, %c0_i32 : i32, i32
  }
}

</mosaic_0001>

<llo_original>
// kernel: linear_value_fn.1
$region0: #{linear_value_fn.1}
  #allocation0 [shape = 'u32[]', space=smem, size = 0x4, offset = 0x4, fixed_abs, tag = 'smem constant byte address 0x4 - core index']
  #allocation1 [shape = 'u32[72,128]{1,0:T(1,128)}', space=vmem, size = 0x9000, scoped, tag = 'internal scratch']
  #allocation2 [shape = 'f32[1]{0:T(128)S(6)}', space=smem, size = 0x200, scoped, tag = 'scoped memory for linear_value_fn.1']
  %s0 = inlined_call_operand.hbm [shape: f32[8,32], index: 0, kind: input, shape index: {}]
  %s1 = inlined_call_operand.vmem [shape: f32[1,32], index: 1, kind: input, shape index: {}]
  %s2 = inlined_call_operand.<no memory space> [shape: f32[1], index: 2, kind: input, shape index: {}]
  %s3 = inlined_call_operand.vmem [shape: f32[8,1], index: 3, kind: output, shape index: {}]
  %s4 = sld [smem:[#allocation0]]
  $region26: #{linear_value_fn.1} parent=0
    _
  %s6 = ssub.s32 1, %s4
  %s7 = scalar_select 0, %s6, %s4
  %8 = sst [smem:[#allocation2]] %s2
  $region1: #{linear_value_fn.1} parent=0
    #allocation3 [shape = 'u8[4096]{0}', space=vmem, size = 0x1000, scoped, tag = 'input window, operand 0, single buffered']
    #allocation4 [shape = 's32[1]{0}', space=sflag, size = 0x4, scoped, tag = 'scoped memory for linear_value_fn.1']
    %9 = vsyncpa [#allocation4], 0
    // Predicated region
    $region2: #{linear_value_fn.1} parent=1 // pred_check
      _
    $region3: #{linear_value_fn.1} parent=1 // pred_check_branch
      %11 = sbr.rel (0) target = $region5
    $region4: #{linear_value_fn.1} parent=1 // pred_region
      %13 = vsyncadd [#allocation4], 0
      %s15 = sshll.u32 %s0, 4
      %s16 = int_to_ptr.hbm [resolvable:$true] %s15
      %s17 = sshll.u32 [#allocation3], 4
      %s18 = int_to_ptr.vmem [resolvable:$true] %s17
      %20 = dma.hbm_to_vmem [thread:$0]  %s16, 128, %s18, [#allocation4]
    $region5: #{linear_value_fn.1} parent=1 // pred_fallthru
      _
    // Predicated region
    $region6: #{linear_value_fn.1} parent=1 // pred_check
      _
    $region7: #{linear_value_fn.1} parent=1 // pred_check_branch
      %22 = sbr.rel (0) target = $region9
    $region8: #{linear_value_fn.1} parent=1 // pred_region
      _
    $region9: #{linear_value_fn.1} parent=1 // pred_fallthru
      _
    // Predicated region
    $region10: #{linear_value_fn.1} parent=1 // pred_check
      _
    $region11: #{linear_value_fn.1} parent=1 // pred_check_branch
      %24 = sbr.rel (0) target = $region13
    $region12: #{linear_value_fn.1} parent=1 // pred_region
      _
    $region13: #{linear_value_fn.1} parent=1 // pred_fallthru
      _
    // Predicated region
    $region14: #{linear_value_fn.1} parent=1 // pred_check
      _
    $region15: #{linear_value_fn.1} parent=1 // pred_check_branch
      %26 = sbr.rel (0) target = $region17
    $region16: #{linear_value_fn.1} parent=1 // pred_region
      %28 = dma.done [#allocation4], 128
    $region17: #{linear_value_fn.1} parent=1 // pred_fallthru
      _
    %v29 = vld [vmem:[#allocation3] sm:$0xff]
    %v30 = vld [vmem:[%s1] sm:$0x1]
    %s31 = sld [smem:[#allocation2]]
    %v33 = vperm.slane %v30, 0
    %v35 = vmul.f32 %v29, %v33
    %vm36 = vcmask 261120
    %v37 = vsel %vm36, %v35, 0.0
    %38 = vadd.xlane.f32.xlu0 %v37
    %v39 = vpop.xlane.xlu0 %38
    %v40 = vstv %s31
    %v41 = vadd.f32 %v39, %v40
    %vm42 = vcmask 7168
    %43 = vst.msk [vmem:[%s3] sm:$0xff] %vm42, %v41
    // Predicated region
    $region18: #{linear_value_fn.1} parent=1 // pred_check
      _
    $region19: #{linear_value_fn.1} parent=1 // pred_check_branch
      %45 = sbr.rel (0) target = $region21
    $region20: #{linear_value_fn.1} parent=1 // pred_region
      _
    $region21: #{linear_value_fn.1} parent=1 // pred_fallthru
      _
    // Predicated region
    $region22: #{linear_value_fn.1} parent=1 // pred_check
      _
    $region23: #{linear_value_fn.1} parent=1 // pred_check_branch
      %47 = sbr.rel (0) target = $region25
    $region24: #{linear_value_fn.1} parent=1 // pred_region
      _
    $region25: #{linear_value_fn.1} parent=1 // pred_fallthru
      _
    %48 = vsyncpa [#allocation4], 1

</llo_original>
